<compile_context>
chip_gen: v7x
topology: tpu7x:2x2x1
jax: 0.10.0
libtpu: 0.0.40
codegen_flags: <defaults>
</compile_context>

<pallas_src>
import functools

import jax
import jax.numpy as jnp
from jax.experimental import pallas as pl
from jax.experimental.pallas import tpu as pltpu

LN_EPS = 1e-5
_INV_SQRT2 = 0.7071067811865476


def _round_up(x, m):
    return (x + m - 1) // m * m


def classifier_head_kernel(
    x_ref,     # (bb, H)  activations tile
    w1_ref,    # (H, H)   dense1 weight   (grid-invariant)
    w2_ref,    # (H, H)   dense2 weight   (grid-invariant)
    wo_ref,    # (H, Lp)  out_proj weight (lane-padded, grid-invariant)
    vec_ref,   # (8, W)   packed vectors: g1,be1,b1,g2,be2,b2,bo,<pad>
    o_ref,     # (bb, Lp) logits tile (lane-dense)
    *,
    hidden,
    lanes_out,
    approx_gelu,
    tail_dtype,
):
    f32 = jnp.float32
    vecs = vec_ref[...]                          # (8, W) f32, one load
    g1, be1, b1 = vecs[0:1, :hidden], vecs[1:2, :hidden], vecs[2:3, :hidden]
    g2, be2, b2 = vecs[3:4, :hidden], vecs[4:5, :hidden], vecs[5:6, :hidden]
    bo = vecs[6:7, :lanes_out]

    mm_dtype = w1_ref.dtype                      # bf16 (default) or f32

    def gelu(h):
        if approx_gelu:
            # tanh-approx -> EUP slot (essentially free vs the VALU-bound chain)
            return jax.nn.gelu(h, approximate=True)
        # exact erf GELU (PyTorch nn.GELU() default) behind the parity flag
        return 0.5 * h * (1.0 + jax.lax.erf(h * _INV_SQRT2))

    def layer_norm(x, gamma, beta):
        # Single-pass stats (independent reductions), f32 for stability.
        xf = x.astype(f32)
        mu = jnp.mean(xf, axis=-1, keepdims=True)
        ms = jnp.mean(xf * xf, axis=-1, keepdims=True)
        inv = jax.lax.rsqrt(ms - mu * mu + LN_EPS)
        scale = (inv * gamma).astype(tail_dtype)          # fold gamma into inv
        return ((x.astype(tail_dtype) - mu.astype(tail_dtype)) * scale
                + beta.astype(tail_dtype))

    def block(x, gamma, beta, w_ref, bias):
        h = layer_norm(x, gamma, beta)
        h = jnp.dot(h.astype(mm_dtype), w_ref[...],
                    preferred_element_type=f32)           # f32 accumulation
        h = (h + bias).astype(tail_dtype)                 # bias/GELU/residual in tail dtype
        return gelu(h) + x.astype(tail_dtype)             # dropout = identity (eval)

    x = x_ref[...]
    x = block(x, g1, be1, w1_ref, b1)
    x = block(x, g2, be2, w2_ref, b2)

    logits = jnp.dot(x.astype(mm_dtype), wo_ref[...],
                     preferred_element_type=f32) + bo
    o_ref[...] = logits.astype(o_ref.dtype)


@functools.partial(
    jax.jit,
    static_argnames=("block_b", "matmul_dtype", "approx_gelu", "tail_dtype"))
def classifier_head(features, params, *, block_b=512,
                    matmul_dtype=jnp.bfloat16, approx_gelu=True,
                    tail_dtype=jnp.float32):
    """features: (B, H). params: dict of weights. Returns (B, L) f32 logits."""
    B, H = features.shape
    L = params["wo"].shape[1]
    Lp = _round_up(L, 128)          # lane-dense output width
    W = max(H, Lp)                  # packed-vector row width

    # ---- balanced batch tiling: pick the grid first, then the tile ----
    B8 = _round_up(B, 8)
    max_bb = max(8, _round_up(min(block_b, B8), 8))
    grid_n = -(-B8 // max_bb)                 # minimum steps with tiles <= block_b
    if B8 > 8:
        grid_n = max(grid_n, 2)               # >=2 steps: megacore + DMA pipelining
        if B8 >= 64 and grid_n < 4:
            grid_n = 4                        # >=4 when batch allows (balance + overlap)
        if grid_n % 2:
            grid_n += 1                       # even grid: no 2:1 core imbalance on v7x
    bb = _round_up(-(-B8 // grid_n), 8)       # tile rows derived from the grid
    B_pad = grid_n * bb
    grid = (grid_n,)

    x = features
    if B_pad != B:
        x = jnp.pad(x, ((0, B_pad - B), (0, 0)))

    # ---- weights: cast for MXU; pad out_proj columns for lane-dense stores ----
    w1 = params["w1"].astype(matmul_dtype)
    w2 = params["w2"].astype(matmul_dtype)
    wo = jnp.pad(params["wo"], ((0, 0), (0, Lp - L))).astype(matmul_dtype)

    # ---- pack the seven vector params into one (8, W) f32 array ----
    def _row(v):
        v = v.reshape(1, -1).astype(jnp.float32)
        return jnp.pad(v, ((0, 0), (0, W - v.shape[1])))

    vecs = jnp.concatenate(
        [_row(params["g1"]), _row(params["be1"]), _row(params["b1"]),
         _row(params["g2"]), _row(params["be2"]), _row(params["b2"]),
         _row(params["bo"]), jnp.zeros((1, W), jnp.float32)],
        axis=0)  # (8, W)

    # Grid-invariant params: single-buffer them once they get big (v7x 64 MiB VMEM).
    single_buffer_weights = H >= 1024

    def _invariant_spec(shape):
        if single_buffer_weights:
            return pl.BlockSpec(shape, lambda i: (0, 0),
                                pipeline_mode=pl.Buffered(1))
        return pl.BlockSpec(shape, lambda i: (0, 0))

    # ---- VMEM budget (buffer counts included exactly once) ----
    n_wbuf = 1 if single_buffer_weights else 2
    w_itemsize = jnp.dtype(matmul_dtype).itemsize
    w_bytes = (w1.size + w2.size + wo.size) * w_itemsize * n_wbuf
    vec_bytes = 8 * W * 4 * n_wbuf
    act_bytes = 2 * bb * H * features.dtype.itemsize     # double-buffered input tile
    out_bytes = 2 * bb * Lp * 4                          # double-buffered output tile
    needed = w_bytes + vec_bytes + act_bytes + out_bytes
    vmem_limit = int(min(max(needed + (8 << 20), 32 << 20), 100 << 20))

    cost = pl.CostEstimate(
        flops=2 * B_pad * H * (2 * H + Lp) + 12 * B_pad * H,
        transcendentals=2 * B_pad * H,                   # two GELUs (tanh or erf)
        bytes_accessed=B_pad * H * 4 + B_pad * Lp * 4 + w_bytes // n_wbuf + 8 * W * 4,
    )

    kernel = functools.partial(classifier_head_kernel, hidden=H, lanes_out=Lp,
                               approx_gelu=approx_gelu, tail_dtype=tail_dtype)

    out = pl.pallas_call(
        kernel,
        out_shape=jax.ShapeDtypeStruct((B_pad, Lp), jnp.float32),
        grid_spec=pltpu.PrefetchScalarGridSpec(
            num_scalar_prefetch=0,
            grid=grid,
            in_specs=[
                pl.BlockSpec((bb, H), lambda i: (i, 0)),    # activations
                _invariant_spec((H, H)),                    # w1
                _invariant_spec((H, H)),                    # w2
                _invariant_spec((H, Lp)),                   # wo
                _invariant_spec((8, W)),                    # packed vectors
            ],
            out_specs=pl.BlockSpec((bb, Lp), lambda i: (i, 0)),
        ),
        compiler_params=pltpu.CompilerParams(
            dimension_semantics=("parallel",),
            vmem_limit_bytes=vmem_limit,
        ),
        cost_estimate=cost,
    )(x, w1, w2, wo, vecs)

    return out[:B, :L]


def init_params(key, hidden_size, num_labels):
    ks = jax.random.split(key, 6)
    scale = 1.0 / jnp.sqrt(hidden_size)
    return {
        # LayerNorm1
        "g1": jnp.ones((hidden_size,), jnp.float32),
        "be1": jnp.zeros((hidden_size,), jnp.float32),
        # dense1 (stored as [in, out] == PyTorch W.T)
        "w1": jax.random.normal(ks[0], (hidden_size, hidden_size), jnp.float32) * scale,
        "b1": jax.random.normal(ks[1], (hidden_size,), jnp.float32) * 0.01,
        # LayerNorm2
        "g2": jnp.ones((hidden_size,), jnp.float32),
        "be2": jnp.zeros((hidden_size,), jnp.float32),
        # dense2
        "w2": jax.random.normal(ks[2], (hidden_size, hidden_size), jnp.float32) * scale,
        "b2": jax.random.normal(ks[3], (hidden_size,), jnp.float32) * 0.01,
        # out_proj
        "wo": jax.random.normal(ks[4], (hidden_size, num_labels), jnp.float32) * scale,
        "bo": jax.random.normal(ks[5], (num_labels,), jnp.float32) * 0.01,
    }


def classifier_head_ref(features, params, matmul_dtype=jnp.float32,
                        approx_gelu=False):
    """Pure-JAX reference matching the PyTorch forward (eval mode)."""
    def ln(x, g, b):
        mu = jnp.mean(x, -1, keepdims=True)
        var = jnp.mean((x - mu) ** 2, -1, keepdims=True)
        return (x - mu) * jax.lax.rsqrt(var + LN_EPS) * g + b

    def dot(a, w):
        return jnp.dot(a.astype(matmul_dtype), w.astype(matmul_dtype),
                       preferred_element_type=jnp.float32)

    x = features
    h = ln(x, params["g1"], params["be1"])
    h = dot(h, params["w1"]) + params["b1"]
    h = jax.nn.gelu(h, approximate=approx_gelu)
    x = h + x
    h = ln(x, params["g2"], params["be2"])
    h = dot(h, params["w2"]) + params["b2"]
    h = jax.nn.gelu(h, approximate=approx_gelu)
    x = h + x
    return dot(x, params["wo"]) + params["bo"]


if __name__ == "__main__":
    key = jax.random.PRNGKey(0)
    k_x, k_p = jax.random.split(key)

    # batch=200 deliberately NOT a multiple of the tile -> exercises the
    # balanced-grid + padding path (grid=4, bb=56, 24 padded rows).
    batch, hidden_size, num_labels = 200, 128, 8
    features = jax.random.normal(k_x, (batch, hidden_size), jnp.float32)
    params = init_params(k_p, hidden_size, num_labels)

    # 1) exact-semantics path: f32 matmul operands + exact erf GELU, f32 tail
    logits_exact = jax.block_until_ready(
        classifier_head(features, params, matmul_dtype=jnp.float32,
                        approx_gelu=False, tail_dtype=jnp.float32))
    ref_exact = classifier_head_ref(features, params,
                                    matmul_dtype=jnp.float32, approx_gelu=False)
    assert logits_exact.shape == (batch, num_labels)
    assert jnp.allclose(logits_exact, ref_exact, atol=1e-3, rtol=1e-3), \
        "f32/exact-GELU kernel mismatch vs exact reference"

    # 2) default fast path: bf16 MXU operands + tanh GELU, f32 elementwise tail
    logits_fast = jax.block_until_ready(classifier_head(features, params))
    ref_fast = classifier_head_ref(features, params,
                                   matmul_dtype=jnp.bfloat16, approx_gelu=True)
    assert logits_fast.shape == (batch, num_labels)
    assert jnp.allclose(logits_fast, ref_fast, atol=1e-2, rtol=1e-2), \
        "default (bf16 MXU, tanh GELU) kernel mismatch vs bf16 reference"

    # 3) bf16 elementwise tail (v6e/v7x option) — looser tolerance per review
    logits_bf16tail = jax.block_until_ready(
        classifier_head(features, params, tail_dtype=jnp.bfloat16))
    assert logits_bf16tail.shape == (batch, num_labels)
    assert jnp.allclose(logits_bf16tail, ref_fast, atol=5e-2, rtol=5e-2), \
        "bf16-elementwise-tail kernel mismatch vs bf16 reference"

    print("KERNEL_OK")
</pallas_src>

<mosaic_0001>
module attributes {stable_mosaic.version = 11 : i64} {
  func.func @classifier_head_kernel(%arg0: i32, %arg1: memref<56x128xf32, #tpu.memory_space<vmem>>, %arg2: memref<128x128xf32, #tpu.memory_space<vmem>>, %arg3: memref<128x128xf32, #tpu.memory_space<vmem>>, %arg4: memref<128x128xf32, #tpu.memory_space<vmem>>, %arg5: memref<8x128xf32, #tpu.memory_space<vmem>>, %arg6: memref<56x128xf32, #tpu.memory_space<vmem>>) attributes {dimension_semantics = [#tpu.dimension_semantics<parallel>], iteration_bounds = array<i64: 4>, scalar_prefetch = 0 : i64, scratch_operands = 0 : i64, tpu.core_type = #tpu.core_type<tc>, window_params = [{transform_indices = @transform_0, window_bounds = array<i64: 56, 128>}, {pipeline_mode = #tpu.pipeline_mode<synchronous>, transform_indices = @transform_1, window_bounds = array<i64: 128, 128>}, {pipeline_mode = #tpu.pipeline_mode<synchronous>, transform_indices = @transform_2, window_bounds = array<i64: 128, 128>}, {pipeline_mode = #tpu.pipeline_mode<synchronous>, transform_indices = @transform_3, window_bounds = array<i64: 128, 128>}, {pipeline_mode = #tpu.pipeline_mode<synchronous>, transform_indices = @transform_4, window_bounds = array<i64: 8, 128>}, {transform_indices = @transform_5, window_bounds = array<i64: 56, 128>}]} {
    %c0 = arith.constant 0 : index
    %c0_0 = arith.constant 0 : index
    %0 = vector.load %arg5[%c0, %c0_0] : memref<8x128xf32, #tpu.memory_space<vmem>>, vector<8x128xf32>
    %1 = vector.extract_strided_slice %0 {offsets = [0, 0], sizes = [1, 128], strides = [1, 1]} : vector<8x128xf32> to vector<1x128xf32>
    %2 = vector.extract_strided_slice %0 {offsets = [1, 0], sizes = [1, 128], strides = [1, 1]} : vector<8x128xf32> to vector<1x128xf32>
    %3 = vector.extract_strided_slice %0 {offsets = [2, 0], sizes = [1, 128], strides = [1, 1]} : vector<8x128xf32> to vector<1x128xf32>
    %4 = vector.extract_strided_slice %0 {offsets = [3, 0], sizes = [1, 128], strides = [1, 1]} : vector<8x128xf32> to vector<1x128xf32>
    %5 = vector.extract_strided_slice %0 {offsets = [4, 0], sizes = [1, 128], strides = [1, 1]} : vector<8x128xf32> to vector<1x128xf32>
    %6 = vector.extract_strided_slice %0 {offsets = [5, 0], sizes = [1, 128], strides = [1, 1]} : vector<8x128xf32> to vector<1x128xf32>
    %7 = vector.extract_strided_slice %0 {offsets = [6, 0], sizes = [1, 128], strides = [1, 1]} : vector<8x128xf32> to vector<1x128xf32>
    %c0_1 = arith.constant 0 : index
    %c0_2 = arith.constant 0 : index
    %8 = vector.load %arg1[%c0_1, %c0_2] : memref<56x128xf32, #tpu.memory_space<vmem>>, vector<56x128xf32>
    %cst = arith.constant dense<0.000000e+00> : vector<56xf32>
    %9 = vector.multi_reduction <add>, %8, %cst [1] : vector<56x128xf32> to vector<56xf32>
    %10 = vector.shape_cast %9 : vector<56xf32> to vector<56x1xf32>
    %cst_3 = arith.constant 1.280000e+02 : f32
    %11 = vector.broadcast %cst_3 : f32 to vector<56x1xf32>
    %12 = arith.divf %10, %11 : vector<56x1xf32>
    %13 = arith.mulf %8, %8 : vector<56x128xf32>
    %cst_4 = arith.constant dense<0.000000e+00> : vector<56xf32>
    %14 = vector.multi_reduction <add>, %13, %cst_4 [1] : vector<56x128xf32> to vector<56xf32>
    %15 = vector.shape_cast %14 : vector<56xf32> to vector<56x1xf32>
    %cst_5 = arith.constant 1.280000e+02 : f32
    %16 = vector.broadcast %cst_5 : f32 to vector<56x1xf32>
    %17 = arith.divf %15, %16 : vector<56x1xf32>
    %18 = arith.mulf %12, %12 : vector<56x1xf32>
    %19 = arith.subf %17, %18 : vector<56x1xf32>
    %cst_6 = arith.constant 9.99999974E-6 : f32
    %20 = vector.broadcast %cst_6 : f32 to vector<56x1xf32>
    %21 = arith.addf %19, %20 : vector<56x1xf32>
    %22 = math.rsqrt %21 : vector<56x1xf32>
    %23 = vector.broadcast %22 : vector<56x1xf32> to vector<56x128xf32>
    %24 = vector.broadcast %1 : vector<1x128xf32> to vector<56x128xf32>
    %25 = arith.mulf %23, %24 : vector<56x128xf32>
    %26 = vector.broadcast %12 : vector<56x1xf32> to vector<56x128xf32>
    %27 = arith.subf %8, %26 : vector<56x128xf32>
    %28 = arith.mulf %27, %25 : vector<56x128xf32>
    %29 = vector.broadcast %2 : vector<1x128xf32> to vector<56x128xf32>
    %30 = arith.addf %28, %29 : vector<56x128xf32>
    %c0_7 = arith.constant 0 : index
    %c0_8 = arith.constant 0 : index
    %31 = vector.load %arg2[%c0_7, %c0_8] : memref<128x128xf32, #tpu.memory_space<vmem>>, vector<128x128xf32>
    %cst_9 = arith.constant dense<0.000000e+00> : vector<56x128xf32>
    %32 = tpu.matmul %30, %31, %cst_9 {dimension_numbers = #tpu.dot_dimension_numbers<[1], [0], [0], [1], [0, 0, 1, 1], [], []>} : vector<56x128xf32>, vector<128x128xf32>, vector<56x128xf32> -> vector<56x128xf32>
    %33 = vector.broadcast %3 : vector<1x128xf32> to vector<56x128xf32>
    %34 = arith.addf %32, %33 : vector<56x128xf32>
    %cst_10 = arith.constant 5.000000e-01 : f32
    %35 = vector.broadcast %cst_10 : f32 to vector<56x128xf32>
    %36 = arith.mulf %35, %34 : vector<56x128xf32>
    %cst_11 = arith.constant 0.707106769 : f32
    %37 = vector.broadcast %cst_11 : f32 to vector<56x128xf32>
    %38 = arith.mulf %34, %37 : vector<56x128xf32>
    %39 = math.erf %38 : vector<56x128xf32>
    %cst_12 = arith.constant 1.000000e+00 : f32
    %40 = vector.broadcast %cst_12 : f32 to vector<56x128xf32>
    %41 = arith.addf %40, %39 : vector<56x128xf32>
    %42 = arith.mulf %36, %41 : vector<56x128xf32>
    %43 = arith.addf %42, %8 : vector<56x128xf32>
    %cst_13 = arith.constant dense<0.000000e+00> : vector<56xf32>
    %44 = vector.multi_reduction <add>, %43, %cst_13 [1] : vector<56x128xf32> to vector<56xf32>
    %45 = vector.shape_cast %44 : vector<56xf32> to vector<56x1xf32>
    %cst_14 = arith.constant 1.280000e+02 : f32
    %46 = vector.broadcast %cst_14 : f32 to vector<56x1xf32>
    %47 = arith.divf %45, %46 : vector<56x1xf32>
    %48 = arith.mulf %43, %43 : vector<56x128xf32>
    %cst_15 = arith.constant dense<0.000000e+00> : vector<56xf32>
    %49 = vector.multi_reduction <add>, %48, %cst_15 [1] : vector<56x128xf32> to vector<56xf32>
    %50 = vector.shape_cast %49 : vector<56xf32> to vector<56x1xf32>
    %cst_16 = arith.constant 1.280000e+02 : f32
    %51 = vector.broadcast %cst_16 : f32 to vector<56x1xf32>
    %52 = arith.divf %50, %51 : vector<56x1xf32>
    %53 = arith.mulf %47, %47 : vector<56x1xf32>
    %54 = arith.subf %52, %53 : vector<56x1xf32>
    %cst_17 = arith.constant 9.99999974E-6 : f32
    %55 = vector.broadcast %cst_17 : f32 to vector<56x1xf32>
    %56 = arith.addf %54, %55 : vector<56x1xf32>
    %57 = math.rsqrt %56 : vector<56x1xf32>
    %58 = vector.broadcast %57 : vector<56x1xf32> to vector<56x128xf32>
    %59 = vector.broadcast %4 : vector<1x128xf32> to vector<56x128xf32>
    %60 = arith.mulf %58, %59 : vector<56x128xf32>
    %61 = vector.broadcast %47 : vector<56x1xf32> to vector<56x128xf32>
    %62 = arith.subf %43, %61 : vector<56x128xf32>
    %63 = arith.mulf %62, %60 : vector<56x128xf32>
    %64 = vector.broadcast %5 : vector<1x128xf32> to vector<56x128xf32>
    %65 = arith.addf %63, %64 : vector<56x128xf32>
    %c0_18 = arith.constant 0 : index
    %c0_19 = arith.constant 0 : index
    %66 = vector.load %arg3[%c0_18, %c0_19] : memref<128x128xf32, #tpu.memory_space<vmem>>, vector<128x128xf32>
    %cst_20 = arith.constant dense<0.000000e+00> : vector<56x128xf32>
    %67 = tpu.matmul %65, %66, %cst_20 {dimension_numbers = #tpu.dot_dimension_numbers<[1], [0], [0], [1], [0, 0, 1, 1], [], []>} : vector<56x128xf32>, vector<128x128xf32>, vector<56x128xf32> -> vector<56x128xf32>
    %68 = vector.broadcast %6 : vector<1x128xf32> to vector<56x128xf32>
    %69 = arith.addf %67, %68 : vector<56x128xf32>
    %cst_21 = arith.constant 5.000000e-01 : f32
    %70 = vector.broadcast %cst_21 : f32 to vector<56x128xf32>
    %71 = arith.mulf %70, %69 : vector<56x128xf32>
    %cst_22 = arith.constant 0.707106769 : f32
    %72 = vector.broadcast %cst_22 : f32 to vector<56x128xf32>
    %73 = arith.mulf %69, %72 : vector<56x128xf32>
    %74 = math.erf %73 : vector<56x128xf32>
    %cst_23 = arith.constant 1.000000e+00 : f32
    %75 = vector.broadcast %cst_23 : f32 to vector<56x128xf32>
    %76 = arith.addf %75, %74 : vector<56x128xf32>
    %77 = arith.mulf %71, %76 : vector<56x128xf32>
    %78 = arith.addf %77, %43 : vector<56x128xf32>
    %c0_24 = arith.constant 0 : index
    %c0_25 = arith.constant 0 : index
    %79 = vector.load %arg4[%c0_24, %c0_25] : memref<128x128xf32, #tpu.memory_space<vmem>>, vector<128x128xf32>
    %cst_26 = arith.constant dense<0.000000e+00> : vector<56x128xf32>
    %80 = tpu.matmul %78, %79, %cst_26 {dimension_numbers = #tpu.dot_dimension_numbers<[1], [0], [0], [1], [0, 0, 1, 1], [], []>} : vector<56x128xf32>, vector<128x128xf32>, vector<56x128xf32> -> vector<56x128xf32>
    %81 = vector.broadcast %7 : vector<1x128xf32> to vector<56x128xf32>
    %82 = arith.addf %80, %81 : vector<56x128xf32>
    %c0_27 = arith.constant 0 : index
    %c0_28 = arith.constant 0 : index
    %83 = vector.load %arg6[%c0_27, %c0_28] : memref<56x128xf32, #tpu.memory_space<vmem>>, vector<56x128xf32>
    tpu.vector_store %arg6[%c0_27, %c0_28], %82 {strides = array<i32>} : memref<56x128xf32, #tpu.memory_space<vmem>>, vector<56x128xf32>,
    return
  }
  func.func @transform_0(%arg0: i32) -> (i32, i32) {
    %c0_i32 = arith.constant 0 : i32
    %c0_i32_0 = arith.constant 0 : i32
    return %arg0, %c0_i32 : i32, i32
  }
  func.func @transform_1(%arg0: i32) -> (i32, i32) {
    %c0_i32 = arith.constant 0 : i32
    %c0_i32_0 = arith.constant 0 : i32
    %c0_i32_1 = arith.constant 0 : i32
    return %c0_i32, %c0_i32_0 : i32, i32
  }
  func.func @transform_2(%arg0: i32) -> (i32, i32) {
    %c0_i32 = arith.constant 0 : i32
    %c0_i32_0 = arith.constant 0 : i32
    %c0_i32_1 = arith.constant 0 : i32
    return %c0_i32, %c0_i32_0 : i32, i32
  }
  func.func @transform_3(%arg0: i32) -> (i32, i32) {
    %c0_i32 = arith.constant 0 : i32
    %c0_i32_0 = arith.constant 0 : i32
    %c0_i32_1 = arith.constant 0 : i32
    return %c0_i32, %c0_i32_0 : i32, i32
  }
  func.func @transform_4(%arg0: i32) -> (i32, i32) {
    %c0_i32 = arith.constant 0 : i32
    %c0_i32_0 = arith.constant 0 : i32
    %c0_i32_1 = arith.constant 0 : i32
    return %c0_i32, %c0_i32_0 : i32, i32
  }
  func.func @transform_5(%arg0: i32) -> (i32, i32) {
    %c0_i32 = arith.constant 0 : i32
    %c0_i32_0 = arith.constant 0 : i32
    return %arg0, %c0_i32 : i32, i32
  }
}

</mosaic_0001>

<llo_original>
// kernel: classifier_head.1
$region0: #{classifier_head.1}
  #allocation0 [shape = 'u32[]', space=smem, size = 0x4, offset = 0x4, fixed_abs, tag = 'smem constant byte address 0x4 - core index']
  #allocation1 [shape = 'u32[144,128]{1,0:T(1,128)}', space=vmem, size = 0x12000, scoped, tag = 'internal scratch']
  %s0 = inlined_call_operand.vmem [shape: f32[224,128], index: 0, kind: input, shape index: {}]
  %s1 = inlined_call_operand.vmem [shape: f32[128,128], index: 1, kind: input, shape index: {}]
  %s2 = inlined_call_operand.vmem [shape: f32[128,128], index: 2, kind: input, shape index: {}]
  %s3 = inlined_call_operand.vmem [shape: f32[128,128], index: 3, kind: input, shape index: {}]
  %s4 = inlined_call_operand.vmem [shape: f32[8,128], index: 4, kind: input, shape index: {}]
  %s5 = inlined_call_operand.vmem [shape: f32[224,128], index: 5, kind: output, shape index: {}]
  %s6 = sld [smem:[#allocation0]]
  $region53: #{classifier_head.1} parent=0
    _
  %s8 = ssub.s32 1, %s6
  %s9 = scalar_select 0, %s8, %s6
  loop: start=0, step=1, limit=6
  $region2: #{classifier_head.1} parent=0 // loop_pre_header
    _
  $region3: #{classifier_head.1} parent=0 // loop_header
    %s11 = sphi 0, %s15
    %p12 = scmp.ge.s32.totalorder %s11, 6
    %s21 = sphi 0, %s23
    %s24 = sphi 0, %s21
    %s25 = sphi 0, %s24
    %s41 = sphi 0, %s25
    %s45 = sphi 0, %s45
    %s47 = sphi 0, %s45
    %s48 = sphi 0, %s47
    %s62 = sphi 0, %s48
    %s66 = sphi 0, %s66
    %s68 = sphi 0, %s66
    %s69 = sphi 0, %s68
    %s83 = sphi 0, %s69
    %s87 = sphi 0, %s87
    %s89 = sphi 0, %s87
    %s90 = sphi 0, %s89
    %s104 = sphi 0, %s90
    %s108 = sphi 0, %s108
    %s110 = sphi 0, %s108
    %s111 = sphi 0, %s110
    %s125 = sphi 0, %s111
    %s131 = sphi 0, %s133
    %s134 = sphi 0, %s131
    %s135 = sphi 0, %s134
    %s151 = sphi 0, %s135
  $region4: #{classifier_head.1} parent=0 // loop_header_branch
    %14 = sbr.rel (%p12) target = $region8
  $region5: #{classifier_head.1} parent=0 // loop_body
    %s16 = ssub.s32 %s11, 1
    %s17 = ssub.s32 %s11, 2
    %s18 = sadd.s32 %s11, 1
    %s19 = ssub.s32 %s11, %s18
    %p20 = scmp.eq.s32.totalorder %s19, 0
    %s22 = sadd.s32 %s21, 1
    %s23 = scalar_select %p20, %s21, %s22
    %p26 = pneg %p20
    %p27 = scmp.eq.s32.totalorder %s11, 3
    %p28 = por %p26, %p27
    %p29 = scmp.ne.s32.totalorder %s21, %s24
    %p30 = scmp.eq.s32.totalorder %s11, 0
    %p31 = por %p29, %p30
    %p32 = scmp.ne.s32.totalorder %s21, %s24
    %p33 = scmp.eq.s32.totalorder %s16, 3
    %p34 = por %p32, %p33
    %p35 = scmp.ne.s32.totalorder %s24, %s25
    %p36 = scmp.eq.s32.totalorder %s16, 0
    %p37 = por %p35, %p36
    %p38 = scmp.ne.s32.totalorder %s24, %s25
    %p39 = scmp.eq.s32.totalorder %s17, 3
    %p40 = por %p38, %p39
    %p42 = scmp.ne.s32.totalorder %s25, %s41
    %p43 = scmp.eq.s32.totalorder %s17, 0
    %p44 = por %p42, %p43
    %s46 = sadd.s32 %s45, 1
    %p49 = scmp.eq.s32.totalorder %s11, 3
    %p50 = scmp.ne.s32.totalorder %s45, %s47
    %p51 = scmp.eq.s32.totalorder %s11, 0
    %p52 = por %p50, %p51
    %p53 = scmp.ne.s32.totalorder %s45, %s47
    %p54 = scmp.eq.s32.totalorder %s16, 3
    %p55 = por %p53, %p54
    %p56 = scmp.ne.s32.totalorder %s47, %s48
    %p57 = scmp.eq.s32.totalorder %s16, 0
    %p58 = por %p56, %p57
    %p59 = scmp.ne.s32.totalorder %s47, %s48
    %p60 = scmp.eq.s32.totalorder %s17, 3
    %p61 = por %p59, %p60
    %p63 = scmp.ne.s32.totalorder %s48, %s62
    %p64 = scmp.eq.s32.totalorder %s17, 0
    %p65 = por %p63, %p64
    %s67 = sadd.s32 %s66, 1
    %p70 = scmp.eq.s32.totalorder %s11, 3
    %p71 = scmp.ne.s32.totalorder %s66, %s68
    %p72 = scmp.eq.s32.totalorder %s11, 0
    %p73 = por %p71, %p72
    %p74 = scmp.ne.s32.totalorder %s66, %s68
    %p75 = scmp.eq.s32.totalorder %s16, 3
    %p76 = por %p74, %p75
    %p77 = scmp.ne.s32.totalorder %s68, %s69
    %p78 = scmp.eq.s32.totalorder %s16, 0
    %p79 = por %p77, %p78
    %p80 = scmp.ne.s32.totalorder %s68, %s69
    %p81 = scmp.eq.s32.totalorder %s17, 3
    %p82 = por %p80, %p81
    %p84 = scmp.ne.s32.totalorder %s69, %s83
    %p85 = scmp.eq.s32.totalorder %s17, 0
    %p86 = por %p84, %p85
    %s88 = sadd.s32 %s87, 1
    %p91 = scmp.eq.s32.totalorder %s11, 3
    %p92 = scmp.ne.s32.totalorder %s87, %s89
    %p93 = scmp.eq.s32.totalorder %s11, 0
    %p94 = por %p92, %p93
    %p95 = scmp.ne.s32.totalorder %s87, %s89
    %p96 = scmp.eq.s32.totalorder %s16, 3
    %p97 = por %p95, %p96
    %p98 = scmp.ne.s32.totalorder %s89, %s90
    %p99 = scmp.eq.s32.totalorder %s16, 0
    %p100 = por %p98, %p99
    %p101 = scmp.ne.s32.totalorder %s89, %s90
    %p102 = scmp.eq.s32.totalorder %s17, 3
    %p103 = por %p101, %p102
    %p105 = scmp.ne.s32.totalorder %s90, %s104
    %p106 = scmp.eq.s32.totalorder %s17, 0
    %p107 = por %p105, %p106
    %s109 = sadd.s32 %s108, 1
    %p112 = scmp.eq.s32.totalorder %s11, 3
    %p113 = scmp.ne.s32.totalorder %s108, %s110
    %p114 = scmp.eq.s32.totalorder %s11, 0
    %p115 = por %p113, %p114
    %p116 = scmp.ne.s32.totalorder %s108, %s110
    %p117 = scmp.eq.s32.totalorder %s16, 3
    %p118 = por %p116, %p117
    %p119 = scmp.ne.s32.totalorder %s110, %s111
    %p120 = scmp.eq.s32.totalorder %s16, 0
    %p121 = por %p119, %p120
    %p122 = scmp.ne.s32.totalorder %s110, %s111
    %p123 = scmp.eq.s32.totalorder %s17, 3
    %p124 = por %p122, %p123
    %p126 = scmp.ne.s32.totalorder %s111, %s125
    %p127 = scmp.eq.s32.totalorder %s17, 0
    %p128 = por %p126, %p127
    %s129 = ssub.s32 %s11, %s18
    %p130 = scmp.eq.s32.totalorder %s129, 0
    %s132 = sadd.s32 %s131, 1
    %s133 = scalar_select %p130, %s131, %s132
    %p136 = pneg %p130
    %p137 = scmp.eq.s32.totalorder %s11, 3
    %p138 = por %p136, %p137
    %p139 = scmp.ne.s32.totalorder %s131, %s134
    %p140 = scmp.eq.s32.totalorder %s11, 0
    %p141 = por %p139, %p140
    %p142 = scmp.ne.s32.totalorder %s131, %s134
    %p143 = scmp.eq.s32.totalorder %s16, 3
    %p144 = por %p142, %p143
    %p145 = scmp.ne.s32.totalorder %s134, %s135
    %p146 = scmp.eq.s32.totalorder %s16, 0
    %p147 = por %p145, %p146
    %p148 = scmp.ne.s32.totalorder %s134, %s135
    %p149 = scmp.eq.s32.totalorder %s17, 3
    %p150 = por %p148, %p149
    %p152 = scmp.ne.s32.totalorder %s135, %s151
    %p153 = scmp.eq.s32.totalorder %s17, 0
    %p154 = por %p152, %p153
    %p155 = scmp.le.s32.totalorder 1, %s11
    %p156 = scmp.lt.s32.totalorder %s11, 5
    %p157 = pnand %p155, %p156
    %p158 = pneg %p157
    // Predicated region
    $region9: #{classifier_head.1} parent=5 // pred_check
      _
    $region10: #{classifier_head.1} parent=5 // pred_check_branch
      %160 = sbr.rel (%p157) target = $region12
    $region11: #{classifier_head.1} parent=5 // pred_region
      %s161 = ssub.s32 %s11, 1
      // Predicated region
      $region13: #{classifier_head.1} parent=11 // pred_check
        %p162 = pneg %p58
      $region14: #{classifier_head.1} parent=11 // pred_check_branch
        %164 = sbr.rel (%p162) target = $region16
      $region15: #{classifier_head.1} parent=11 // pred_region
        _
      $region16: #{classifier_head.1} parent=11 // pred_fallthru
        _
      // Predicated region
      $region17: #{classifier_head.1} parent=11 // pred_check
        %p165 = pneg %p79
      $region18: #{classifier_head.1} parent=11 // pred_check_branch
        %167 = sbr.rel (%p165) target = $region20
      $region19: #{classifier_head.1} parent=11 // pred_region
        _
      $region20: #{classifier_head.1} parent=11 // pred_fallthru
        _
      // Predicated region
      $region21: #{classifier_head.1} parent=11 // pred_check
        %p168 = pneg %p100
      $region22: #{classifier_head.1} parent=11 // pred_check_branch
        %170 = sbr.rel (%p168) target = $region24
      $region23: #{classifier_head.1} parent=11 // pred_region
        _
      $region24: #{classifier_head.1} parent=11 // pred_fallthru
        _
      // Predicated region
      $region25: #{classifier_head.1} parent=11 // pred_check
        %p171 = pneg %p121
      $region26: #{classifier_head.1} parent=11 // pred_check_branch
        %173 = sbr.rel (%p171) target = $region28
      $region27: #{classifier_head.1} parent=11 // pred_region
        _
      $region28: #{classifier_head.1} parent=11 // pred_fallthru
        _
    $region12: #{classifier_head.1} parent=5 // pred_fallthru
      _
    %p174 = scmp.lt.s32.totalorder %s11, 4
    // Predicated region
    $region29: #{classifier_head.1} parent=5 // pred_check
      %p175 = pneg %p174
    $region30: #{classifier_head.1} parent=5 // pred_check_branch
      %177 = sbr.rel (%p175) target = $region32
    $region31: #{classifier_head.1} parent=5 // pred_region
      // Predicated region
      $region33: #{classifier_head.1} parent=31 // pred_check
        %p178 = pneg %p31
      $region34: #{classifier_head.1} parent=31 // pred_check_branch
        %180 = sbr.rel (%p178) target = $region36
      $region35: #{classifier_head.1} parent=31 // pred_region
        %s181 = smul.u32 7, %s11
        %p182 = scmp.lt.s32.totalorder %s181, 27
        %s183 = scalar_select %p182, %s181, 27
        %s184 = smul.addr %s183, 8
        %s185 = scalar_lea.vmem %s0, %s184
        %s186 = smul.u32 7, %s11
      $region36: #{classifier_head.1} parent=31 // pred_fallthru
        _
    $region32: #{classifier_head.1} parent=5 // pred_fallthru
      _
    %p187 = scmp.le.s32.totalorder 1, %s11
    %p188 = scmp.lt.s32.totalorder %s11, 5
    %p189 = pnand %p187, %p188
    %p190 = pneg %p189
    // Predicated region
    $region37: #{classifier_head.1} parent=5 // pred_check
      _
    $region38: #{classifier_head.1} parent=5 // pred_check_branch
      %192 = sbr.rel (%p189) target = $region40
    $region39: #{classifier_head.1} parent=5 // pred_region
      %s193 = ssub.s32 %s11, 1
      %s194 = smul.u32 7, %s16
      %p195 = scmp.lt.s32.totalorder %s194, 27
      %s196 = scalar_select %p195, %s194, 27
      %s197 = smul.addr %s196, 8
      %s198 = scalar_lea.vmem %s0, %s197
      %p199 = pneg %p37
      %p200 = pneg %p34
      %p201 = pneg %p58
      %p202 = pneg %p55
      %p203 = pneg %p79
      %p204 = pneg %p76
      %p205 = pneg %p100
      %p206 = pneg %p97
      %p207 = pneg %p121
      %p208 = pneg %p118
      %p209 = pneg %p147
      %p210 = pneg %p144
      %s211 = smul.u32 7, %s16
      %p212 = scmp.lt.s32.totalorder %s211, 27
      %s213 = scalar_select %p212, %s211, 27
      %s214 = smul.addr %s213, 8
      %s215 = scalar_lea.vmem %s5, %s214
      %s216 = smul.u32 7, %s16
      %p217 = scmp.lt.s32.totalorder %s216, 27
      %s218 = scalar_select %p217, %s216, 27
      %s219 = smul.addr %s218, 8
      %s220 = scalar_lea.vmem %s0, %s219
      %s221 = smul.u32 7, %s16
      %s222 = smul.u32 7, %s16
      %p223 = scmp.lt.s32.totalorder %s222, 27
      %s224 = scalar_select %p223, %s222, 27
      %s225 = smul.addr %s224, 8
      %s226 = scalar_lea.vmem %s5, %s225
      %s227 = smul.u32 7, %s16
      %v228 = vld [vmem:[%s4] sm:$0xff]
      %v229 = vld [vmem:[%s220] sm:$0xff]
      %v230 = vld [vmem:[%s220 + $0x8] sm:$0xff]
      %v231 = vld [vmem:[%s220 + $0x10] sm:$0xff]
      %v232 = vld [vmem:[%s220 + $0x18] sm:$0xff]
      %v233 = vld [vmem:[%s220 + $0x20] sm:$0xff]
      %v234 = vld [vmem:[%s220 + $0x28] sm:$0xff]
      %v235 = vld [vmem:[%s220 + $0x30] sm:$0xff]
      %236 = vadd.xlane.f32.xlu0 %v229
      %v237 = vpop.xlane.xlu0 %236
      %238 = vadd.xlane.f32.xlu0 %v230
      %v239 = vpop.xlane.xlu0 %238
      %240 = vadd.xlane.f32.xlu0 %v231
      %v241 = vpop.xlane.xlu0 %240
      %242 = vadd.xlane.f32.xlu0 %v232
      %v243 = vpop.xlane.xlu0 %242
      %244 = vadd.xlane.f32.xlu0 %v233
      %v245 = vpop.xlane.xlu0 %244
      %246 = vadd.xlane.f32.xlu0 %v234
      %v247 = vpop.xlane.xlu0 %246
      %248 = vadd.xlane.f32.xlu0 %v235
      %v249 = vpop.xlane.xlu0 %248
      %v250 = vrcp.pop 128.0
      %v251 = vmul.f32 %v237, %v250
      %v252 = vmul.f32 %v239, %v250
      %v253 = vmul.f32 %v241, %v250
      %v254 = vmul.f32 %v243, %v250
      %v255 = vmul.f32 %v245, %v250
      %v256 = vmul.f32 %v247, %v250
      %v257 = vmul.f32 %v249, %v250
      %v258 = vmul.f32 %v229, %v229
      %v259 = vmul.f32 %v230, %v230
      %v260 = vmul.f32 %v231, %v231
      %v261 = vmul.f32 %v232, %v232
      %v262 = vmul.f32 %v233, %v233
      %v263 = vmul.f32 %v234, %v234
      %v264 = vmul.f32 %v235, %v235
      %265 = vadd.xlane.f32.xlu0 %v258
      %v266 = vpop.xlane.xlu0 %265
      %267 = vadd.xlane.f32.xlu0 %v259
      %v268 = vpop.xlane.xlu0 %267
      %269 = vadd.xlane.f32.xlu0 %v260
      %v270 = vpop.xlane.xlu0 %269
      %271 = vadd.xlane.f32.xlu0 %v261
      %v272 = vpop.xlane.xlu0 %271
      %273 = vadd.xlane.f32.xlu0 %v262
      %v274 = vpop.xlane.xlu0 %273
      %275 = vadd.xlane.f32.xlu0 %v263
      %v276 = vpop.xlane.xlu0 %275
      %277 = vadd.xlane.f32.xlu0 %v264
      %v278 = vpop.xlane.xlu0 %277
      %v279 = vmul.f32 %v266, %v250
      %v280 = vmul.f32 %v268, %v250
      %v281 = vmul.f32 %v270, %v250
      %v282 = vmul.f32 %v272, %v250
      %v283 = vmul.f32 %v274, %v250
      %v284 = vmul.f32 %v276, %v250
      %v285 = vmul.f32 %v278, %v250
      %v286 = vmul.f32 %v251, %v251
      %v287 = vmul.f32 %v252, %v252
      %v288 = vmul.f32 %v253, %v253
      %v289 = vmul.f32 %v254, %v254
      %v290 = vmul.f32 %v255, %v255
      %v291 = vmul.f32 %v256, %v256
      %v292 = vmul.f32 %v257, %v257
      %v293 = vsub.f32 %v279, %v286
      %v294 = vsub.f32 %v280, %v287
      %v295 = vsub.f32 %v281, %v288
      %v296 = vsub.f32 %v282, %v289
      %v297 = vsub.f32 %v283, %v290
      %v298 = vsub.f32 %v284, %v291
      %v299 = vsub.f32 %v285, %v292
      %v300 = vadd.f32 %v293, 1e-05
      %v301 = vadd.f32 %v294, 1e-05
      %v302 = vadd.f32 %v295, 1e-05
      %v303 = vadd.f32 %v296, 1e-05
      %v304 = vadd.f32 %v297, 1e-05
      %v305 = vadd.f32 %v298, 1e-05
      %v306 = vadd.f32 %v299, 1e-05
      %v307 = vrsqrt.pop %v300
      %v308 = vrsqrt.pop %v301
      %v309 = vrsqrt.pop %v302
      %v310 = vrsqrt.pop %v303
      %v311 = vrsqrt.pop %v304
      %v312 = vrsqrt.pop %v305
      %v313 = vrsqrt.pop %v306
      %v314 = vlaneseq
      %v315 = vshrl.u32 %v314, 7
      %v316 = vsub.s32 0, %v315
      %v317 = vrot.slane %v228, %v316
      %v318 = vmul.f32 %v307, %v317
      %v319 = vmul.f32 %v308, %v317
      %v320 = vmul.f32 %v309, %v317
      %v321 = vmul.f32 %v310, %v317
      %v322 = vmul.f32 %v311, %v317
      %v323 = vmul.f32 %v312, %v317
      %v324 = vmul.f32 %v313, %v317
      %v325 = vsub.f32 %v229, %v251
      %v326 = vsub.f32 %v230, %v252
      %v327 = vsub.f32 %v231, %v253
      %v328 = vsub.f32 %v232, %v254
      %v329 = vsub.f32 %v233, %v255
      %v330 = vsub.f32 %v234, %v256
      %v331 = vsub.f32 %v235, %v257
      %v332 = vmul.f32 %v325, %v318
      %v333 = vmul.f32 %v326, %v319
      %v334 = vmul.f32 %v327, %v320
      %v335 = vmul.f32 %v328, %v321
      %v336 = vmul.f32 %v329, %v322
      %v337 = vmul.f32 %v330, %v323
      %v338 = vmul.f32 %v331, %v324
      %v339 = vlaneseq
      %v340 = vshrl.u32 %v339, 7
      %v341 = vsub.s32 1, %v340
      %v342 = vrot.slane %v228, %v341
      %v343 = vadd.f32 %v332, %v342
      %v344 = vadd.f32 %v333, %v342
      %v345 = vadd.f32 %v334, %v342
      %v346 = vadd.f32 %v335, %v342
      %v347 = vadd.f32 %v336, %v342
      %v348 = vadd.f32 %v337, %v342
      %v349 = vadd.f32 %v338, %v342
      %v350 = vld [vmem:[%s1] sm:$0xff]
      %v351 = vld [vmem:[%s1 + $0x8] sm:$0xff]
      %v352 = vld [vmem:[%s1 + $0x10] sm:$0xff]
      %v353 = vld [vmem:[%s1 + $0x18] sm:$0xff]
      %v354 = vld [vmem:[%s1 + $0x20] sm:$0xff]
      %v355 = vld [vmem:[%s1 + $0x28] sm:$0xff]
      %v356 = vld [vmem:[%s1 + $0x30] sm:$0xff]
      %v357 = vld [vmem:[%s1 + $0x38] sm:$0xff]
      %v358 = vld [vmem:[%s1 + $0x40] sm:$0xff]
      %v359 = vld [vmem:[%s1 + $0x48] sm:$0xff]
      %v360 = vld [vmem:[%s1 + $0x50] sm:$0xff]
      %v361 = vld [vmem:[%s1 + $0x58] sm:$0xff]
      %v362 = vld [vmem:[%s1 + $0x60] sm:$0xff]
      %v363 = vld [vmem:[%s1 + $0x68] sm:$0xff]
      %v364 = vld [vmem:[%s1 + $0x70] sm:$0xff]
      %v365 = vld [vmem:[%s1 + $0x78] sm:$0xff]
      %v366 = vlaneseq
      %v367 = vshrl.u32 %v366, 7
      %v368 = vsub.s32 2, %v367
      %v369 = vrot.slane %v228, %v368
      %370 = vmatprep.subr.mxu0 0.0
      %371 = vmatpush1.msra.mxu0 %v350
      %372 = vmatprep.subr.mxu0 0.0
      %373 = vmatpush1.msra.mxu0 %v351
      %374 = vmatprep.subr.mxu0 0.0
      %375 = vmatpush1.msra.mxu0 %v352
      %376 = vmatprep.subr.mxu0 0.0
      %377 = vmatpush1.msra.mxu0 %v353
      %378 = vmatprep.subr.mxu0 0.0
      %379 = vmatpush1.msra.mxu0 %v354
      %380 = vmatprep.subr.mxu0 0.0
      %381 = vmatpush1.msra.mxu0 %v355
      %382 = vmatprep.subr.mxu0 0.0
      %383 = vmatpush1.msra.mxu0 %v356
      %384 = vmatprep.subr.mxu0 0.0
      %385 = vmatpush1.msra.mxu0 %v357
      %386 = vmatprep.subr.mxu0 0.0
      %387 = vmatpush1.msra.mxu0 %v358
      %388 = vmatprep.subr.mxu0 0.0
      %389 = vmatpush1.msra.mxu0 %v359
      %390 = vmatprep.subr.mxu0 0.0
      %391 = vmatpush1.msra.mxu0 %v360
      %392 = vmatprep.subr.mxu0 0.0
      %393 = vmatpush1.msra.mxu0 %v361
      %394 = vmatprep.subr.mxu0 0.0
      %395 = vmatpush1.msra.mxu0 %v362
      %396 = vmatprep.subr.mxu0 0.0
      %397 = vmatpush1.msra.mxu0 %v363
      %398 = vmatprep.subr.mxu0 0.0
      %399 = vmatpush1.msra.mxu0 %v364
      %400 = vmatprep.subr.mxu0 0.0
      %401 = vmatpush1.msra.mxu0 %v365
      %402 = vmatprep.subr.mxu0 0.0
      %403 = vmatpush1.msra.mxu0 0.0
      %404 = vmatprep.subr.mxu0 0.0
      %405 = vmatpush1.msra.mxu0 0.0
      %406 = vmatprep.subr.mxu0 0.0
      %407 = vmatpush1.msra.mxu0 0.0
      %408 = vmatprep.subr.mxu0 0.0
      %409 = vmatpush1.msra.mxu0 0.0
      %410 = vmatprep.subr.mxu0 0.0
      %411 = vmatpush1.msra.mxu0 0.0
      %412 = vmatprep.subr.mxu0 0.0
      %413 = vmatpush1.msra.mxu0 0.0
      %414 = vmatprep.subr.mxu0 0.0
      %415 = vmatpush1.msra.mxu0 0.0
      %416 = vmatprep.subr.mxu0 0.0
      %417 = vmatpush1.msra.mxu0 0.0
      %418 = vmatprep.subr.mxu0 0.0
      %419 = vmatpush1.msra.mxu0 0.0
      %420 = vmatprep.subr.mxu0 0.0
      %421 = vmatpush1.msra.mxu0 0.0
      %422 = vmatprep.subr.mxu0 0.0
      %423 = vmatpush1.msra.mxu0 0.0
      %424 = vmatprep.subr.mxu0 0.0
      %425 = vmatpush1.msra.mxu0 0.0
      %426 = vmatprep.subr.mxu0 0.0
      %427 = vmatpush1.msra.mxu0 0.0
      %428 = vmatprep.subr.mxu0 0.0
      %429 = vmatpush1.msra.mxu0 0.0
      %430 = vmatprep.subr.mxu0 0.0
      %431 = vmatpush1.msra.mxu0 0.0
      %432 = vmatprep.subr.mxu0 0.0
      %433 = vmatpush1.msra.mxu0 0.0
      %434 = vmatprep.mubr.f32.mxu0 0.0
      %435 = vmatmul.mubr.f32.gmra.mrb[0].mxu0 %v343
      %v436 = vpop.f32.mrb[0].mxu0
      %v437 = vadd.f32 %v369, %v436
      %v438 = vpop.f32.mrb[0].mxu0
      %439 = vmatprep.mubr.f32.mxu0 0.0
      %440 = vmatmul.mubr.f32.gmra.mrb[0].mxu0 %v344
      %v441 = vpop.f32.mrb[0].mxu0
      %v442 = vadd.f32 %v369, %v441
      %v443 = vpop.f32.mrb[0].mxu0
      %444 = vmatprep.mubr.f32.mxu0 0.0
      %445 = vmatmul.mubr.f32.gmra.mrb[0].mxu0 %v345
      %v446 = vpop.f32.mrb[0].mxu0
      %v447 = vadd.f32 %v369, %v446
      %v448 = vpop.f32.mrb[0].mxu0
      %449 = vmatprep.mubr.f32.mxu0 0.0
      %450 = vmatmul.mubr.f32.gmra.mrb[0].mxu0 %v346
      %v451 = vpop.f32.mrb[0].mxu0
      %v452 = vadd.f32 %v369, %v451
      %v453 = vpop.f32.mrb[0].mxu0
      %454 = vmatprep.mubr.f32.mxu0 0.0
      %455 = vmatmul.mubr.f32.gmra.mrb[0].mxu0 %v347
      %v456 = vpop.f32.mrb[0].mxu0
      %v457 = vadd.f32 %v369, %v456
      %v458 = vpop.f32.mrb[0].mxu0
      %459 = vmatprep.mubr.f32.mxu0 0.0
      %460 = vmatmul.mubr.f32.gmra.mrb[0].mxu0 %v348
      %v461 = vpop.f32.mrb[0].mxu0
      %v462 = vadd.f32 %v369, %v461
      %v463 = vpop.f32.mrb[0].mxu0
      %464 = vmatprep.mubr.f32.mxu0 0.0
      %465 = vmatmul.mubr.f32.gmra.mrb[0].mxu0 %v349
      %v466 = vpop.f32.mrb[0].mxu0
      %v467 = vadd.f32 %v369, %v466
      %v468 = vpop.f32.mrb[0].mxu0
      %469 = vdwg.mxu0
      %v470 = vmul.f32 %v437, 0.5
      %v471 = vmul.f32 %v442, 0.5
      %v472 = vmul.f32 %v447, 0.5
      %v473 = vmul.f32 %v452, 0.5
      %v474 = vmul.f32 %v457, 0.5
      %v475 = vmul.f32 %v462, 0.5
      %v476 = vmul.f32 %v467, 0.5
      %v477 = vmul.f32 %v437, 0.70710677
      %v478 = vmul.f32 %v442, 0.70710677
      %v479 = vmul.f32 %v447, 0.70710677
      %v480 = vmul.f32 %v452, 0.70710677
      %v481 = vmul.f32 %v457, 0.70710677
      %v482 = vmul.f32 %v462, 0.70710677
      %v483 = vmul.f32 %v467, 0.70710677
      %v484 = verf.f32.pop %v477
      %v485 = verf.f32.pop %v478
      %v486 = verf.f32.pop %v479
      %v487 = verf.f32.pop %v480
      %v488 = verf.f32.pop %v481
      %v489 = verf.f32.pop %v482
      %v490 = verf.f32.pop %v483
      %v491 = vadd.f32 %v484, 1.0
      %v492 = vadd.f32 %v485, 1.0
      %v493 = vadd.f32 %v486, 1.0
      %v494 = vadd.f32 %v487, 1.0
      %v495 = vadd.f32 %v488, 1.0
      %v496 = vadd.f32 %v489, 1.0
      %v497 = vadd.f32 %v490, 1.0
      %v498 = vmul.f32 %v470, %v491
      %v499 = vmul.f32 %v471, %v492
      %v500 = vmul.f32 %v472, %v493
      %v501 = vmul.f32 %v473, %v494
      %v502 = vmul.f32 %v474, %v495
      %v503 = vmul.f32 %v475, %v496
      %v504 = vmul.f32 %v476, %v497
      %v505 = vadd.f32 %v498, %v229
      %v506 = vadd.f32 %v499, %v230
      %v507 = vadd.f32 %v500, %v231
      %v508 = vadd.f32 %v501, %v232
      %v509 = vadd.f32 %v502, %v233
      %v510 = vadd.f32 %v503, %v234
      %v511 = vadd.f32 %v504, %v235
      %512 = vadd.xlane.f32.xlu0 %v505
      %v513 = vpop.xlane.xlu0 %512
      %514 = vadd.xlane.f32.xlu0 %v506
      %v515 = vpop.xlane.xlu0 %514
      %516 = vadd.xlane.f32.xlu0 %v507
      %v517 = vpop.xlane.xlu0 %516
      %518 = vadd.xlane.f32.xlu0 %v508
      %v519 = vpop.xlane.xlu0 %518
      %520 = vadd.xlane.f32.xlu0 %v509
      %v521 = vpop.xlane.xlu0 %520
      %522 = vadd.xlane.f32.xlu0 %v510
      %v523 = vpop.xlane.xlu0 %522
      %524 = vadd.xlane.f32.xlu0 %v511
      %v525 = vpop.xlane.xlu0 %524
      %v526 = vmul.f32 %v513, %v250
      %v527 = vmul.f32 %v515, %v250
      %v528 = vmul.f32 %v517, %v250
      %v529 = vmul.f32 %v519, %v250
      %v530 = vmul.f32 %v521, %v250
      %v531 = vmul.f32 %v523, %v250
      %v532 = vmul.f32 %v525, %v250
      %v533 = vmul.f32 %v505, %v505
      %v534 = vmul.f32 %v506, %v506
      %v535 = vmul.f32 %v507, %v507
      %v536 = vmul.f32 %v508, %v508
      %v537 = vmul.f32 %v509, %v509
      %v538 = vmul.f32 %v510, %v510
      %v539 = vmul.f32 %v511, %v511
      %540 = vadd.xlane.f32.xlu0 %v533
      %v541 = vpop.xlane.xlu0 %540
      %542 = vadd.xlane.f32.xlu0 %v534
      %v543 = vpop.xlane.xlu0 %542
      %544 = vadd.xlane.f32.xlu0 %v535
      %v545 = vpop.xlane.xlu0 %544
      %546 = vadd.xlane.f32.xlu0 %v536
      %v547 = vpop.xlane.xlu0 %546
      %548 = vadd.xlane.f32.xlu0 %v537
      %v549 = vpop.xlane.xlu0 %548
      %550 = vadd.xlane.f32.xlu0 %v538
      %v551 = vpop.xlane.xlu0 %550
      %552 = vadd.xlane.f32.xlu0 %v539
      %v553 = vpop.xlane.xlu0 %552
      %v554 = vmul.f32 %v541, %v250
      %v555 = vmul.f32 %v543, %v250
      %v556 = vmul.f32 %v545, %v250
      %v557 = vmul.f32 %v547, %v250
      %v558 = vmul.f32 %v549, %v250
      %v559 = vmul.f32 %v551, %v250
      %v560 = vmul.f32 %v553, %v250
      %v561 = vmul.f32 %v526, %v526
      %v562 = vmul.f32 %v527, %v527
      %v563 = vmul.f32 %v528, %v528
      %v564 = vmul.f32 %v529, %v529
      %v565 = vmul.f32 %v530, %v530
      %v566 = vmul.f32 %v531, %v531
      %v567 = vmul.f32 %v532, %v532
      %v568 = vsub.f32 %v554, %v561
      %v569 = vsub.f32 %v555, %v562
      %v570 = vsub.f32 %v556, %v563
      %v571 = vsub.f32 %v557, %v564
      %v572 = vsub.f32 %v558, %v565
      %v573 = vsub.f32 %v559, %v566
      %v574 = vsub.f32 %v560, %v567
      %v575 = vadd.f32 %v568, 1e-05
      %v576 = vadd.f32 %v569, 1e-05
      %v577 = vadd.f32 %v570, 1e-05
      %v578 = vadd.f32 %v571, 1e-05
      %v579 = vadd.f32 %v572, 1e-05
      %v580 = vadd.f32 %v573, 1e-05
      %v581 = vadd.f32 %v574, 1e-05
      %v582 = vrsqrt.pop %v575
      %v583 = vrsqrt.pop %v576
      %v584 = vrsqrt.pop %v577
      %v585 = vrsqrt.pop %v578
      %v586 = vrsqrt.pop %v579
      %v587 = vrsqrt.pop %v580
      %v588 = vrsqrt.pop %v581
      %v589 = vlaneseq
      %v590 = vshrl.u32 %v589, 7
      %v591 = vsub.s32 3, %v590
      %v592 = vrot.slane %v228, %v591
      %v593 = vmul.f32 %v582, %v592
      %v594 = vmul.f32 %v583, %v592
      %v595 = vmul.f32 %v584, %v592
      %v596 = vmul.f32 %v585, %v592
      %v597 = vmul.f32 %v586, %v592
      %v598 = vmul.f32 %v587, %v592
      %v599 = vmul.f32 %v588, %v592
      %v600 = vsub.f32 %v505, %v526
      %v601 = vsub.f32 %v506, %v527
      %v602 = vsub.f32 %v507, %v528
      %v603 = vsub.f32 %v508, %v529
      %v604 = vsub.f32 %v509, %v530
      %v605 = vsub.f32 %v510, %v531
      %v606 = vsub.f32 %v511, %v532
      %v607 = vmul.f32 %v600, %v593
      %v608 = vmul.f32 %v601, %v594
      %v609 = vmul.f32 %v602, %v595
      %v610 = vmul.f32 %v603, %v596
      %v611 = vmul.f32 %v604, %v597
      %v612 = vmul.f32 %v605, %v598
      %v613 = vmul.f32 %v606, %v599
      %v614 = vlaneseq
      %v615 = vshrl.u32 %v614, 7
      %v616 = vsub.s32 4, %v615
      %v617 = vrot.slane %v228, %v616
      %v618 = vadd.f32 %v607, %v617
      %v619 = vadd.f32 %v608, %v617
      %v620 = vadd.f32 %v609, %v617
      %v621 = vadd.f32 %v610, %v617
      %v622 = vadd.f32 %v611, %v617
      %v623 = vadd.f32 %v612, %v617
      %v624 = vadd.f32 %v613, %v617
      %v625 = vld [vmem:[%s2] sm:$0xff]
      %v626 = vld [vmem:[%s2 + $0x8] sm:$0xff]
      %v627 = vld [vmem:[%s2 + $0x10] sm:$0xff]
      %v628 = vld [vmem:[%s2 + $0x18] sm:$0xff]
      %v629 = vld [vmem:[%s2 + $0x20] sm:$0xff]
      %v630 = vld [vmem:[%s2 + $0x28] sm:$0xff]
      %v631 = vld [vmem:[%s2 + $0x30] sm:$0xff]
      %v632 = vld [vmem:[%s2 + $0x38] sm:$0xff]
      %v633 = vld [vmem:[%s2 + $0x40] sm:$0xff]
      %v634 = vld [vmem:[%s2 + $0x48] sm:$0xff]
      %v635 = vld [vmem:[%s2 + $0x50] sm:$0xff]
      %v636 = vld [vmem:[%s2 + $0x58] sm:$0xff]
      %v637 = vld [vmem:[%s2 + $0x60] sm:$0xff]
      %v638 = vld [vmem:[%s2 + $0x68] sm:$0xff]
      %v639 = vld [vmem:[%s2 + $0x70] sm:$0xff]
      %v640 = vld [vmem:[%s2 + $0x78] sm:$0xff]
      %v641 = vlaneseq
      %v642 = vshrl.u32 %v641, 7
      %v643 = vsub.s32 5, %v642
      %v644 = vrot.slane %v228, %v643
      %645 = vmatprep.subr.mxu0 0.0
      %646 = vmatpush1.msra.mxu0 %v625
      %647 = vmatprep.subr.mxu0 0.0
      %648 = vmatpush1.msra.mxu0 %v626
      %649 = vmatprep.subr.mxu0 0.0
      %650 = vmatpush1.msra.mxu0 %v627
      %651 = vmatprep.subr.mxu0 0.0
      %652 = vmatpush1.msra.mxu0 %v628
      %653 = vmatprep.subr.mxu0 0.0
      %654 = vmatpush1.msra.mxu0 %v629
      %655 = vmatprep.subr.mxu0 0.0
      %656 = vmatpush1.msra.mxu0 %v630
      %657 = vmatprep.subr.mxu0 0.0
      %658 = vmatpush1.msra.mxu0 %v631
      %659 = vmatprep.subr.mxu0 0.0
      %660 = vmatpush1.msra.mxu0 %v632
      %661 = vmatprep.subr.mxu0 0.0
      %662 = vmatpush1.msra.mxu0 %v633
      %663 = vmatprep.subr.mxu0 0.0
      %664 = vmatpush1.msra.mxu0 %v634
      %665 = vmatprep.subr.mxu0 0.0
      %666 = vmatpush1.msra.mxu0 %v635
      %667 = vmatprep.subr.mxu0 0.0
      %668 = vmatpush1.msra.mxu0 %v636
      %669 = vmatprep.subr.mxu0 0.0
      %670 = vmatpush1.msra.mxu0 %v637
      %671 = vmatprep.subr.mxu0 0.0
      %672 = vmatpush1.msra.mxu0 %v638
      %673 = vmatprep.subr.mxu0 0.0
      %674 = vmatpush1.msra.mxu0 %v639
      %675 = vmatprep.subr.mxu0 0.0
      %676 = vmatpush1.msra.mxu0 %v640
      %677 = vmatprep.subr.mxu0 0.0
      %678 = vmatpush1.msra.mxu0 0.0
      %679 = vmatprep.subr.mxu0 0.0
      %680 = vmatpush1.msra.mxu0 0.0
      %681 = vmatprep.subr.mxu0 0.0
      %682 = vmatpush1.msra.mxu0 0.0
      %683 = vmatprep.subr.mxu0 0.0
      %684 = vmatpush1.msra.mxu0 0.0
      %685 = vmatprep.subr.mxu0 0.0
      %686 = vmatpush1.msra.mxu0 0.0
      %687 = vmatprep.subr.mxu0 0.0
      %688 = vmatpush1.msra.mxu0 0.0
      %689 = vmatprep.subr.mxu0 0.0
      %690 = vmatpush1.msra.mxu0 0.0
      %691 = vmatprep.subr.mxu0 0.0
      %692 = vmatpush1.msra.mxu0 0.0
      %693 = vmatprep.subr.mxu0 0.0
      %694 = vmatpush1.msra.mxu0 0.0
      %695 = vmatprep.subr.mxu0 0.0
      %696 = vmatpush1.msra.mxu0 0.0
      %697 = vmatprep.subr.mxu0 0.0
      %698 = vmatpush1.msra.mxu0 0.0
      %699 = vmatprep.subr.mxu0 0.0
      %700 = vmatpush1.msra.mxu0 0.0
      %701 = vmatprep.subr.mxu0 0.0
      %702 = vmatpush1.msra.mxu0 0.0
      %703 = vmatprep.subr.mxu0 0.0
      %704 = vmatpush1.msra.mxu0 0.0
      %705 = vmatprep.subr.mxu0 0.0
      %706 = vmatpush1.msra.mxu0 0.0
      %707 = vmatprep.subr.mxu0 0.0
      %708 = vmatpush1.msra.mxu0 0.0
      %709 = vmatprep.mubr.f32.mxu0 0.0
      %710 = vmatmul.mubr.f32.gmra.mrb[0].mxu0 %v618
      %v711 = vpop.f32.mrb[0].mxu0
      %v712 = vadd.f32 %v644, %v711
      %v713 = vpop.f32.mrb[0].mxu0
      %714 = vmatprep.mubr.f32.mxu0 0.0
      %715 = vmatmul.mubr.f32.gmra.mrb[0].mxu0 %v619
      %v716 = vpop.f32.mrb[0].mxu0
      %v717 = vadd.f32 %v644, %v716
      %v718 = vpop.f32.mrb[0].mxu0
      %719 = vmatprep.mubr.f32.mxu0 0.0
      %720 = vmatmul.mubr.f32.gmra.mrb[0].mxu0 %v620
      %v721 = vpop.f32.mrb[0].mxu0
      %v722 = vadd.f32 %v644, %v721
      %v723 = vpop.f32.mrb[0].mxu0
      %724 = vmatprep.mubr.f32.mxu0 0.0
      %725 = vmatmul.mubr.f32.gmra.mrb[0].mxu0 %v621
      %v726 = vpop.f32.mrb[0].mxu0
      %v727 = vadd.f32 %v644, %v726
      %v728 = vpop.f32.mrb[0].mxu0
      %729 = vmatprep.mubr.f32.mxu0 0.0
      %730 = vmatmul.mubr.f32.gmra.mrb[0].mxu0 %v622
      %v731 = vpop.f32.mrb[0].mxu0
      %v732 = vadd.f32 %v644, %v731
      %v733 = vpop.f32.mrb[0].mxu0
      %734 = vmatprep.mubr.f32.mxu0 0.0
      %735 = vmatmul.mubr.f32.gmra.mrb[0].mxu0 %v623
      %v736 = vpop.f32.mrb[0].mxu0
      %v737 = vadd.f32 %v644, %v736
      %v738 = vpop.f32.mrb[0].mxu0
      %739 = vmatprep.mubr.f32.mxu0 0.0
      %740 = vmatmul.mubr.f32.gmra.mrb[0].mxu0 %v624
      %v741 = vpop.f32.mrb[0].mxu0
      %v742 = vadd.f32 %v644, %v741
      %v743 = vpop.f32.mrb[0].mxu0
      %744 = vdwg.mxu0
      %v745 = vmul.f32 %v712, 0.5
      %v746 = vmul.f32 %v717, 0.5
      %v747 = vmul.f32 %v722, 0.5
      %v748 = vmul.f32 %v727, 0.5
      %v749 = vmul.f32 %v732, 0.5
      %v750 = vmul.f32 %v737, 0.5
      %v751 = vmul.f32 %v742, 0.5
      %v752 = vmul.f32 %v712, 0.70710677
      %v753 = vmul.f32 %v717, 0.70710677
      %v754 = vmul.f32 %v722, 0.70710677
      %v755 = vmul.f32 %v727, 0.70710677
      %v756 = vmul.f32 %v732, 0.70710677
      %v757 = vmul.f32 %v737, 0.70710677
      %v758 = vmul.f32 %v742, 0.70710677
      %v759 = verf.f32.pop %v752
      %v760 = verf.f32.pop %v753
      %v761 = verf.f32.pop %v754
      %v762 = verf.f32.pop %v755
      %v763 = verf.f32.pop %v756
      %v764 = verf.f32.pop %v757
      %v765 = verf.f32.pop %v758
      %v766 = vadd.f32 %v759, 1.0
      %v767 = vadd.f32 %v760, 1.0
      %v768 = vadd.f32 %v761, 1.0
      %v769 = vadd.f32 %v762, 1.0
      %v770 = vadd.f32 %v763, 1.0
      %v771 = vadd.f32 %v764, 1.0
      %v772 = vadd.f32 %v765, 1.0
      %v773 = vmul.f32 %v745, %v766
      %v774 = vmul.f32 %v746, %v767
      %v775 = vmul.f32 %v747, %v768
      %v776 = vmul.f32 %v748, %v769
      %v777 = vmul.f32 %v749, %v770
      %v778 = vmul.f32 %v750, %v771
      %v779 = vmul.f32 %v751, %v772
      %v780 = vadd.f32 %v773, %v505
      %v781 = vadd.f32 %v774, %v506
      %v782 = vadd.f32 %v775, %v507
      %v783 = vadd.f32 %v776, %v508
      %v784 = vadd.f32 %v777, %v509
      %v785 = vadd.f32 %v778, %v510
      %v786 = vadd.f32 %v779, %v511
      %v787 = vld [vmem:[%s3] sm:$0xff]
      %v788 = vld [vmem:[%s3 + $0x8] sm:$0xff]
      %v789 = vld [vmem:[%s3 + $0x10] sm:$0xff]
      %v790 = vld [vmem:[%s3 + $0x18] sm:$0xff]
      %v791 = vld [vmem:[%s3 + $0x20] sm:$0xff]
      %v792 = vld [vmem:[%s3 + $0x28] sm:$0xff]
      %v793 = vld [vmem:[%s3 + $0x30] sm:$0xff]
      %v794 = vld [vmem:[%s3 + $0x38] sm:$0xff]
      %v795 = vld [vmem:[%s3 + $0x40] sm:$0xff]
      %v796 = vld [vmem:[%s3 + $0x48] sm:$0xff]
      %v797 = vld [vmem:[%s3 + $0x50] sm:$0xff]
      %v798 = vld [vmem:[%s3 + $0x58] sm:$0xff]
      %v799 = vld [vmem:[%s3 + $0x60] sm:$0xff]
      %v800 = vld [vmem:[%s3 + $0x68] sm:$0xff]
      %v801 = vld [vmem:[%s3 + $0x70] sm:$0xff]
      %v802 = vld [vmem:[%s3 + $0x78] sm:$0xff]
      %v803 = vlaneseq
      %v804 = vshrl.u32 %v803, 7
      %v805 = vsub.s32 6, %v804
      %v806 = vrot.slane %v228, %v805
      %807 = vmatprep.subr.mxu0 0.0
      %808 = vmatpush1.msra.mxu0 %v787
      %809 = vmatprep.subr.mxu0 0.0
      %810 = vmatpush1.msra.mxu0 %v788
      %811 = vmatprep.subr.mxu0 0.0
      %812 = vmatpush1.msra.mxu0 %v789
      %813 = vmatprep.subr.mxu0 0.0
      %814 = vmatpush1.msra.mxu0 %v790
      %815 = vmatprep.subr.mxu0 0.0
      %816 = vmatpush1.msra.mxu0 %v791
      %817 = vmatprep.subr.mxu0 0.0
      %818 = vmatpush1.msra.mxu0 %v792
      %819 = vmatprep.subr.mxu0 0.0
      %820 = vmatpush1.msra.mxu0 %v793
      %821 = vmatprep.subr.mxu0 0.0
      %822 = vmatpush1.msra.mxu0 %v794
      %823 = vmatprep.subr.mxu0 0.0
      %824 = vmatpush1.msra.mxu0 %v795
      %825 = vmatprep.subr.mxu0 0.0
      %826 = vmatpush1.msra.mxu0 %v796
      %827 = vmatprep.subr.mxu0 0.0
      %828 = vmatpush1.msra.mxu0 %v797
      %829 = vmatprep.subr.mxu0 0.0
      %830 = vmatpush1.msra.mxu0 %v798
      %831 = vmatprep.subr.mxu0 0.0
      %832 = vmatpush1.msra.mxu0 %v799
      %833 = vmatprep.subr.mxu0 0.0
      %834 = vmatpush1.msra.mxu0 %v800
      %835 = vmatprep.subr.mxu0 0.0
      %836 = vmatpush1.msra.mxu0 %v801
      %837 = vmatprep.subr.mxu0 0.0
      %838 = vmatpush1.msra.mxu0 %v802
      %839 = vmatprep.subr.mxu0 0.0
      %840 = vmatpush1.msra.mxu0 0.0
      %841 = vmatprep.subr.mxu0 0.0
      %842 = vmatpush1.msra.mxu0 0.0
      %843 = vmatprep.subr.mxu0 0.0
      %844 = vmatpush1.msra.mxu0 0.0
      %845 = vmatprep.subr.mxu0 0.0
      %846 = vmatpush1.msra.mxu0 0.0
      %847 = vmatprep.subr.mxu0 0.0
      %848 = vmatpush1.msra.mxu0 0.0
      %849 = vmatprep.subr.mxu0 0.0
      %850 = vmatpush1.msra.mxu0 0.0
      %851 = vmatprep.subr.mxu0 0.0
      %852 = vmatpush1.msra.mxu0 0.0
      %853 = vmatprep.subr.mxu0 0.0
      %854 = vmatpush1.msra.mxu0 0.0
      %855 = vmatprep.subr.mxu0 0.0
      %856 = vmatpush1.msra.mxu0 0.0
      %857 = vmatprep.subr.mxu0 0.0
      %858 = vmatpush1.msra.mxu0 0.0
      %859 = vmatprep.subr.mxu0 0.0
      %860 = vmatpush1.msra.mxu0 0.0
      %861 = vmatprep.subr.mxu0 0.0
      %862 = vmatpush1.msra.mxu0 0.0
      %863 = vmatprep.subr.mxu0 0.0
      %864 = vmatpush1.msra.mxu0 0.0
      %865 = vmatprep.subr.mxu0 0.0
      %866 = vmatpush1.msra.mxu0 0.0
      %867 = vmatprep.subr.mxu0 0.0
      %868 = vmatpush1.msra.mxu0 0.0
      %869 = vmatprep.subr.mxu0 0.0
      %870 = vmatpush1.msra.mxu0 0.0
      %871 = vmatprep.mubr.f32.mxu0 0.0
      %872 = vmatmul.mubr.f32.gmra.mrb[0].mxu0 %v780
      %v873 = vpop.f32.mrb[0].mxu0
      %v874 = vadd.f32 %v806, %v873
      %v875 = vpop.f32.mrb[0].mxu0
      %876 = vmatprep.mubr.f32.mxu0 0.0
      %877 = vmatmul.mubr.f32.gmra.mrb[0].mxu0 %v781
      %v878 = vpop.f32.mrb[0].mxu0
      %v879 = vadd.f32 %v806, %v878
      %v880 = vpop.f32.mrb[0].mxu0
      %881 = vmatprep.mubr.f32.mxu0 0.0
      %882 = vmatmul.mubr.f32.gmra.mrb[0].mxu0 %v782
      %v883 = vpop.f32.mrb[0].mxu0
      %v884 = vadd.f32 %v806, %v883
      %v885 = vpop.f32.mrb[0].mxu0
      %886 = vmatprep.mubr.f32.mxu0 0.0
      %887 = vmatmul.mubr.f32.gmra.mrb[0].mxu0 %v783
      %v888 = vpop.f32.mrb[0].mxu0
      %v889 = vadd.f32 %v806, %v888
      %v890 = vpop.f32.mrb[0].mxu0
      %891 = vmatprep.mubr.f32.mxu0 0.0
      %892 = vmatmul.mubr.f32.gmra.mrb[0].mxu0 %v784
      %v893 = vpop.f32.mrb[0].mxu0
      %v894 = vadd.f32 %v806, %v893
      %v895 = vpop.f32.mrb[0].mxu0
      %896 = vmatprep.mubr.f32.mxu0 0.0
      %897 = vmatmul.mubr.f32.gmra.mrb[0].mxu0 %v785
      %v898 = vpop.f32.mrb[0].mxu0
      %v899 = vadd.f32 %v806, %v898
      %v900 = vpop.f32.mrb[0].mxu0
      %901 = vmatprep.mubr.f32.mxu0 0.0
      %902 = vmatmul.mubr.f32.gmra.mrb[0].mxu0 %v786
      %v903 = vpop.f32.mrb[0].mxu0
      %v904 = vadd.f32 %v806, %v903
      %v905 = vpop.f32.mrb[0].mxu0
      %906 = vdwg.mxu0
      %907 = vst [vmem:[%s226] sm:$0xff] %v874
      %908 = vst [vmem:[%s226 + $0x8] sm:$0xff] %v879
      %909 = vst [vmem:[%s226 + $0x10] sm:$0xff] %v884
      %910 = vst [vmem:[%s226 + $0x18] sm:$0xff] %v889
      %911 = vst [vmem:[%s226 + $0x20] sm:$0xff] %v894
      %912 = vst [vmem:[%s226 + $0x28] sm:$0xff] %v899
      %913 = vst [vmem:[%s226 + $0x30] sm:$0xff] %v904
      %s914 = smul.u32 7, %s16
      %p915 = scmp.lt.s32.totalorder %s914, 27
      %s916 = scalar_select %p915, %s914, 27
      %s917 = smul.addr %s916, 8
      %s918 = scalar_lea.vmem %s5, %s917
      // Predicated region
      $region41: #{classifier_head.1} parent=39 // pred_check
        %p919 = pneg %p144
      $region42: #{classifier_head.1} parent=39 // pred_check_branch
        %921 = sbr.rel (%p919) target = $region44
      $region43: #{classifier_head.1} parent=39 // pred_region
        %s922 = smul.u32 7, %s16
      $region44: #{classifier_head.1} parent=39 // pred_fallthru
        _
    $region40: #{classifier_head.1} parent=5 // pred_fallthru
      _
    %p923 = scmp.le.s32.totalorder 2, %s11
    // Predicated region
    $region45: #{classifier_head.1} parent=5 // pred_check
      %p924 = pneg %p923
    $region46: #{classifier_head.1} parent=5 // pred_check_branch
      %926 = sbr.rel (%p924) target = $region48
    $region47: #{classifier_head.1} parent=5 // pred_region
      %s927 = ssub.s32 %s11, 2
      // Predicated region
      $region49: #{classifier_head.1} parent=47 // pred_check
        %p928 = pneg %p150
      $region50: #{classifier_head.1} parent=47 // pred_check_branch
        %930 = sbr.rel (%p928) target = $region52
      $region51: #{classifier_head.1} parent=47 // pred_region
        %s931 = smul.u32 7, %s17
        %p932 = scmp.lt.s32.totalorder %s931, 27
        %s933 = scalar_select %p932, %s931, 27
        %s934 = smul.addr %s933, 8
        %s935 = scalar_lea.vmem %s5, %s934
      $region52: #{classifier_head.1} parent=47 // pred_fallthru
        _
    $region48: #{classifier_head.1} parent=5 // pred_fallthru
      _
  $region6: #{classifier_head.1} parent=0 // loop_footer
    %s15 = sadd.s32 1, %s11
  $region7: #{classifier_head.1} parent=0 // loop_footer_branch
    %10 = sbr.rel target = $region3
  $region8: #{classifier_head.1} parent=0 // loop_exit
    _

</llo_original>
